<compile_context>
chip_gen: v5e
topology: v5e:2x2
jax: 0.10.0
libtpu: 0.0.40
codegen_flags: <defaults>
</compile_context>

<pallas_src>
import functools

import jax
import jax.numpy as jnp
from jax import lax
from jax.experimental import pallas as pl
from jax.experimental.pallas import tpu as pltpu


def _decoder_seq_kernel(z_ref, w_ih_ref, w_hh_ref, b_ref, w_proj_ref,
                        b_proj_ref, out_ref, hseq_ref, *, H, hidden,
                        block_b, n_chains):
    Hh = hidden
    tb = block_b
    tb2 = tb // n_chains
    mxu_dtype = w_hh_ref.dtype

    z = z_ref[...].astype(mxu_dtype)      # (tb, E)  cast once
    w_ih = w_ih_ref[...]                  # (E, 4Hh)
    w_hh = w_hh_ref[...]                  # (Hh, 4Hh)
    b = b_ref[...]                        # (1, 4Hh)  f32

    # Input contribution to the gates is identical at every timestep
    # (z is repeat_interleave'd along time), so compute it once.
    x_gates = jnp.dot(z, w_ih, preferred_element_type=jnp.float32) + b  # (tb, 4Hh) f32
    x_parts = tuple(x_gates[ci * tb2:(ci + 1) * tb2, :] for ci in range(n_chains))

    def row_offset(t, ci):
        off = t * tb + ci * tb2
        if isinstance(off, int):
            return off                     # static (unrolled path)
        return pl.multiple_of(off, 8)      # dynamic: assert sublane alignment

    def step(t, hs, cs):
        new_h, new_c = [], []
        # Independent chains: chain-1's MXU/EUP pushes overlap chain-0's
        # result-pop -> VPU latency (FIFO result path on v5e/v6e).
        for ci in range(n_chains):
            h = hs[ci]
            c = cs[ci]
            gates = x_parts[ci] + jnp.dot(h.astype(mxu_dtype), w_hh,
                                          preferred_element_type=jnp.float32)
            # One sigmoid pass + one tanh pass over the full 128-lane gates
            # vreg, then 32-lane slices (2 EUP pushes per chain, not 4).
            sg = jax.nn.sigmoid(gates)
            tg = jnp.tanh(gates)
            i_g = sg[:, 0 * Hh:1 * Hh]
            f_g = sg[:, 1 * Hh:2 * Hh]
            g_g = tg[:, 2 * Hh:3 * Hh]
            o_g = sg[:, 3 * Hh:4 * Hh]
            c_n = f_g * c + i_g * g_g
            h_n = o_g * jnp.tanh(c_n)
            # Time-major, sublane-aligned stash of h_t (f32 so the tb2-row
            # store is a full-sublane unmasked store); projection is hoisted.
            hseq_ref[pl.ds(row_offset(t, ci), tb2), :] = h_n
            new_h.append(h_n)
            new_c.append(c_n)
        return tuple(new_h), tuple(new_c)

    h0 = tuple(jnp.zeros((tb2, Hh), jnp.float32) for _ in range(n_chains))
    c0 = tuple(jnp.zeros((tb2, Hh), jnp.float32) for _ in range(n_chains))

    if H <= 16 and tb <= 32:
        # Small problem: full static unroll gives the LLO scheduler visibility.
        hs_c, cs_c = h0, c0
        for t in range(H):
            hs_c, cs_c = step(t, hs_c, cs_c)
    else:
        # Bound vreg live ranges at larger H / block_b.
        def body(t, carry):
            return step(t, carry[0], carry[1])
        _ = lax.fori_loop(0, H, body, (h0, c0), unroll=2)

    # Single projection matmul over all timesteps, lane-dense (2, H*tb) output:
    # proj[f, r] = sum_k w_proj[f, k] * hseq[r, k]  (rhs-transposed contraction).
    hs_all = hseq_ref[...].astype(mxu_dtype)                       # (H*tb, Hh)
    proj = lax.dot_general(w_proj_ref[...], hs_all,
                           dimension_numbers=(((1,), (1,)), ((), ())),
                           preferred_element_type=jnp.float32)     # (2, H*tb)
    out_ref[...] = jnp.tanh(proj + b_proj_ref[...])                # one store


def _round_up(x, m):
    return ((x + m - 1) // m) * m


def _pad2(r, c):
    return _round_up(max(r, 1), 8) * _round_up(max(c, 1), 128)


def _vmem_limit_bytes(block_b, E, H, hidden, mxu_itemsize):
    est = _pad2(H * block_b, hidden) * 4                 # hseq scratch (f32, lane-padded)
    est += 2 * _pad2(block_b, E) * 4                     # z tile, double-buffered
    est += 2 * _pad2(E, 4 * hidden) * mxu_itemsize       # w_ih
    est += 2 * _pad2(hidden, 4 * hidden) * mxu_itemsize  # w_hh
    est += 2 * _pad2(1, 4 * hidden) * 4                  # b_gates
    est += 2 * _pad2(2, hidden) * mxu_itemsize           # w_proj
    est += 2 * _pad2(2, 1) * 4                           # b_proj
    est += 2 * _pad2(2, H * block_b) * 4                 # output slab
    # Generous 2x + margin, clamped so it stays inside v7x's 64 MiB VMEM.
    return int(min(max(2 * est + (4 << 20), 16 << 20), 48 << 20))


def decoder_seq_params(w_ih, w_hh, b_ih, b_hh, w_proj, b_proj, *, hidden,
                       use_bf16=True):
    """One-time weight prep (transpose/cast). Cache the result across calls."""
    mxu_dtype = jnp.bfloat16 if use_bf16 else jnp.float32
    w_ih = jnp.asarray(w_ih, jnp.float32)
    w_hh = jnp.asarray(w_hh, jnp.float32)
    return (
        w_ih.T.astype(mxu_dtype),                               # (E, 4Hh)
        w_hh.T.astype(mxu_dtype),                               # (Hh, 4Hh)
        (jnp.asarray(b_ih, jnp.float32)
         + jnp.asarray(b_hh, jnp.float32)).reshape(1, 4 * hidden),
        jnp.asarray(w_proj, jnp.float32).astype(mxu_dtype),     # (2, Hh)
        jnp.asarray(b_proj, jnp.float32).reshape(2, 1),         # (2, 1)
    )


def decoder_seq_apply(params, z, *, H, hidden, block_b=None,
                      scratch_budget_bytes=16 << 20):
    """z: (B, embedding_size) -> (B, H, 2).

    block_b: optional batch tile size (multiple of 8). Default: one tile per
    call (best on single-TC v5e/v6e). On v7x with B >= 16, pass B_pad // 2 so
    the "parallel" grid axis engages both TensorCores.
    """
    w_ih_t, w_hh_t, b_gates, w_proj2, b_proj2 = params
    mxu_dtype = w_ih_t.dtype
    B, E = z.shape

    # 8-aligned batch padding -> unmasked sublane stores inside the kernel.
    B_pad = max(8, _round_up(B, 8))
    if block_b is None or block_b <= 0:
        bb = B_pad
        # Cap block_b so the lane-padded (hidden->128) f32 hseq scratch fits.
        while bb > 8 and H * bb * 128 * 4 > scratch_budget_bytes:
            bb //= 2
        block_b = max(8, (bb // 8) * 8)
    else:
        block_b = max(8, (block_b // 8) * 8)
    if B_pad % block_b != 0:
        B_pad = _round_up(B_pad, block_b)
    nb = B_pad // block_b
    # Two interleaved recurrence chains only when each half stays 8-aligned.
    n_chains = 2 if (block_b >= 16 and block_b % 16 == 0) else 1

    z_p = jnp.asarray(z, jnp.float32)
    if B_pad != B:
        z_p = jnp.pad(z_p, ((0, B_pad - B), (0, 0)))

    kernel = functools.partial(_decoder_seq_kernel, H=H, hidden=hidden,
                               block_b=block_b, n_chains=n_chains)
    out = pl.pallas_call(
        kernel,
        out_shape=jax.ShapeDtypeStruct((nb, 2, H * block_b), jnp.float32),
        grid_spec=pltpu.PrefetchScalarGridSpec(
            num_scalar_prefetch=0,
            grid=(nb,),
            in_specs=[
                pl.BlockSpec((block_b, E), lambda i: (i, 0)),          # z tile
                pl.BlockSpec((E, 4 * hidden), lambda i: (0, 0)),       # w_ih
                pl.BlockSpec((hidden, 4 * hidden), lambda i: (0, 0)),  # w_hh
                pl.BlockSpec((1, 4 * hidden), lambda i: (0, 0)),       # b_gates
                pl.BlockSpec((2, hidden), lambda i: (0, 0)),           # w_proj
                pl.BlockSpec((2, 1), lambda i: (0, 0)),                # b_proj
            ],
            out_specs=pl.BlockSpec((None, 2, H * block_b), lambda i: (i, 0, 0)),
            scratch_shapes=[pltpu.VMEM((H * block_b, hidden), jnp.float32)],
        ),
        compiler_params=pltpu.CompilerParams(
            dimension_semantics=("parallel",),
            vmem_limit_bytes=_vmem_limit_bytes(
                block_b, E, H, hidden, jnp.dtype(mxu_dtype).itemsize)),
    )(z_p, w_ih_t, w_hh_t, b_gates, w_proj2, b_proj2)

    # Kernel output: out[i, f, t*block_b + j] is (batch=i*block_b+j, time=t,
    # feature=f). Rearrange to (B, H, 2) and drop the padding rows. Under jit
    # this reshape/transpose fuses with the consumer.
    out = out.reshape(nb, 2, H, block_b).transpose(0, 3, 2, 1).reshape(B_pad, H, 2)
    return out[:B]


def decoder_seq_forward(z, w_ih, w_hh, b_ih, b_hh, w_proj, b_proj, *, H, hidden,
                        block_b=None, use_bf16=True):
    """Convenience one-shot wrapper (prefer caching decoder_seq_params)."""
    params = decoder_seq_params(w_ih, w_hh, b_ih, b_hh, w_proj, b_proj,
                                hidden=hidden, use_bf16=use_bf16)
    return decoder_seq_apply(params, z, H=H, hidden=hidden, block_b=block_b)


def decoder_seq_reference(z, w_ih, w_hh, b_ih, b_hh, w_proj, b_proj, *, H, hidden):
    """Pure-JAX reference matching torch.nn.LSTM(batch_first=True) semantics."""
    B = z.shape[0]
    h = jnp.zeros((B, hidden), jnp.float32)
    c = jnp.zeros((B, hidden), jnp.float32)
    outs = []
    for _ in range(H):
        gates = z @ w_ih.T + b_ih + h @ w_hh.T + b_hh
        i_g = jax.nn.sigmoid(gates[:, 0 * hidden:1 * hidden])
        f_g = jax.nn.sigmoid(gates[:, 1 * hidden:2 * hidden])
        g_g = jnp.tanh(gates[:, 2 * hidden:3 * hidden])
        o_g = jax.nn.sigmoid(gates[:, 3 * hidden:4 * hidden])
        c = f_g * c + i_g * g_g
        h = o_g * jnp.tanh(c)
        outs.append(jnp.tanh(h @ w_proj.T + b_proj))
    return jnp.stack(outs, axis=1)  # (B, H, 2)


if __name__ == "__main__":
    # Small shapes consistent with the module's forward.
    batch = 2
    embedding_size = 32   # z_dim
    hidden_size = 32
    H = 8                 # number of decoded timesteps

    key = jax.random.PRNGKey(0)
    ks = jax.random.split(key, 8)
    bound = 1.0 / (hidden_size ** 0.5)

    z = jax.random.normal(ks[0], (batch, embedding_size), jnp.float32)
    w_ih = jax.random.uniform(ks[1], (4 * hidden_size, embedding_size),
                              jnp.float32, -bound, bound)   # LSTM weight_ih_l0
    w_hh = jax.random.uniform(ks[2], (4 * hidden_size, hidden_size),
                              jnp.float32, -bound, bound)   # LSTM weight_hh_l0
    b_ih = jax.random.uniform(ks[3], (4 * hidden_size,), jnp.float32, -bound, bound)
    b_hh = jax.random.uniform(ks[4], (4 * hidden_size,), jnp.float32, -bound, bound)
    w_proj = jax.random.uniform(ks[5], (2, hidden_size), jnp.float32, -bound, bound)
    b_proj = jax.random.uniform(ks[6], (2,), jnp.float32, -bound, bound)

    ref = decoder_seq_reference(z, w_ih, w_hh, b_ih, b_hh, w_proj, b_proj,
                                H=H, hidden=hidden_size)

    apply_fn = jax.jit(functools.partial(decoder_seq_apply, H=H, hidden=hidden_size))

    # f32-MXU path: strict structural check against the reference.
    params_f32 = decoder_seq_params(w_ih, w_hh, b_ih, b_hh, w_proj, b_proj,
                                    hidden=hidden_size, use_bf16=False)
    out_f32 = jax.block_until_ready(apply_fn(params_f32, z))
    assert out_f32.shape == (batch, H, 2)
    assert jnp.allclose(out_f32, ref, atol=1e-5, rtol=1e-5), "f32 mismatch vs reference"

    # Default bf16-MXU-operand path (f32 accumulation + f32 h/c state).
    params_bf16 = decoder_seq_params(w_ih, w_hh, b_ih, b_hh, w_proj, b_proj,
                                     hidden=hidden_size, use_bf16=True)
    out_bf16 = jax.block_until_ready(apply_fn(params_bf16, z))
    assert out_bf16.shape == (batch, H, 2)
    assert jnp.allclose(out_bf16, ref, atol=3e-2, rtol=3e-2), "bf16 mismatch vs reference"

    print("KERNEL_OK")
</pallas_src>

<mosaic_0001>
module attributes {stable_mosaic.version = 11 : i64} {
  func.func @_decoder_seq_kernel(%arg0: i32, %arg1: memref<8x32xf32, #tpu.memory_space<vmem>>, %arg2: memref<32x128xf32, #tpu.memory_space<vmem>>, %arg3: memref<32x128xf32, #tpu.memory_space<vmem>>, %arg4: memref<1x128xf32, #tpu.memory_space<vmem>>, %arg5: memref<2x32xf32, #tpu.memory_space<vmem>>, %arg6: memref<2x1xf32, #tpu.memory_space<vmem>>, %arg7: memref<1x2x64xf32, #tpu.memory_space<vmem>>, %arg8: memref<64x32xf32, #tpu.memory_space<vmem>>) attributes {dimension_semantics = [#tpu.dimension_semantics<parallel>], iteration_bounds = array<i64: 1>, scalar_prefetch = 0 : i64, scratch_operands = 1 : i64, tpu.core_type = #tpu.core_type<tc>, window_params = [{transform_indices = @transform_0, window_bounds = array<i64: 8, 32>}, {pipeline_mode = #tpu.pipeline_mode<synchronous>, transform_indices = @transform_1, window_bounds = array<i64: 32, 128>}, {pipeline_mode = #tpu.pipeline_mode<synchronous>, transform_indices = @transform_2, window_bounds = array<i64: 32, 128>}, {pipeline_mode = #tpu.pipeline_mode<synchronous>, transform_indices = @transform_3, window_bounds = array<i64: 1, 128>}, {pipeline_mode = #tpu.pipeline_mode<synchronous>, transform_indices = @transform_4, window_bounds = array<i64: 2, 32>}, {pipeline_mode = #tpu.pipeline_mode<synchronous>, transform_indices = @transform_5, window_bounds = array<i64: 2, 1>}, {transform_indices = @transform_6, window_bounds = array<i64: 1, 2, 64>}]} {
    %c0 = arith.constant 0 : index
    %c0_0 = arith.constant 0 : index
    %0 = vector.load %arg1[%c0, %c0_0] : memref<8x32xf32, #tpu.memory_space<vmem>>, vector<8x32xf32>
    %c0_1 = arith.constant 0 : index
    %c0_2 = arith.constant 0 : index
    %1 = vector.load %arg2[%c0_1, %c0_2] : memref<32x128xf32, #tpu.memory_space<vmem>>, vector<32x128xf32>
    %c0_3 = arith.constant 0 : index
    %c0_4 = arith.constant 0 : index
    %2 = vector.load %arg3[%c0_3, %c0_4] : memref<32x128xf32, #tpu.memory_space<vmem>>, vector<32x128xf32>
    %c0_5 = arith.constant 0 : index
    %c0_6 = arith.constant 0 : index
    %3 = vector.load %arg4[%c0_5, %c0_6] : memref<1x128xf32, #tpu.memory_space<vmem>>, vector<1x128xf32>
    %cst = arith.constant dense<0.000000e+00> : vector<8x128xf32>
    %4 = tpu.matmul %0, %1, %cst {dimension_numbers = #tpu.dot_dimension_numbers<[1], [0], [0], [1], [0, 0, 1, 1], [], []>} : vector<8x32xf32>, vector<32x128xf32>, vector<8x128xf32> -> vector<8x128xf32>
    %5 = vector.broadcast %3 : vector<1x128xf32> to vector<8x128xf32>
    %6 = arith.addf %4, %5 : vector<8x128xf32>
    %cst_7 = arith.constant 0.000000e+00 : f32
    %7 = vector.broadcast %cst_7 : f32 to vector<8x32xf32>
    %cst_8 = arith.constant 0.000000e+00 : f32
    %8 = vector.broadcast %cst_8 : f32 to vector<8x32xf32>
    %cst_9 = arith.constant dense<0.000000e+00> : vector<8x128xf32>
    %9 = tpu.matmul %7, %2, %cst_9 {dimension_numbers = #tpu.dot_dimension_numbers<[1], [0], [0], [1], [0, 0, 1, 1], [], []>} : vector<8x32xf32>, vector<32x128xf32>, vector<8x128xf32> -> vector<8x128xf32>
    %10 = arith.addf %6, %9 : vector<8x128xf32>
    %11 = arith.negf %10 : vector<8x128xf32>
    %12 = math.exp %11 : vector<8x128xf32>
    %cst_10 = arith.constant 1.000000e+00 : f32
    %13 = vector.broadcast %cst_10 : f32 to vector<8x128xf32>
    %14 = arith.addf %13, %12 : vector<8x128xf32>
    %15 = arith.divf %13, %14 : vector<8x128xf32>
    %16 = math.tanh %10 : vector<8x128xf32>
    %17 = vector.extract_strided_slice %15 {offsets = [0, 0], sizes = [8, 32], strides = [1, 1]} : vector<8x128xf32> to vector<8x32xf32>
    %18 = vector.extract_strided_slice %15 {offsets = [0, 32], sizes = [8, 32], strides = [1, 1]} : vector<8x128xf32> to vector<8x32xf32>
    %19 = vector.extract_strided_slice %16 {offsets = [0, 64], sizes = [8, 32], strides = [1, 1]} : vector<8x128xf32> to vector<8x32xf32>
    %20 = vector.extract_strided_slice %15 {offsets = [0, 96], sizes = [8, 32], strides = [1, 1]} : vector<8x128xf32> to vector<8x32xf32>
    %21 = arith.mulf %18, %8 : vector<8x32xf32>
    %22 = arith.mulf %17, %19 : vector<8x32xf32>
    %23 = arith.addf %21, %22 : vector<8x32xf32>
    %24 = math.tanh %23 : vector<8x32xf32>
    %25 = arith.mulf %20, %24 : vector<8x32xf32>
    %c0_11 = arith.constant 0 : index
    %c0_12 = arith.constant 0 : index
    %26 = vector.load %arg8[%c0_11, %c0_12] : memref<64x32xf32, #tpu.memory_space<vmem>>, vector<8x32xf32>
    tpu.vector_store %arg8[%c0_11, %c0_12], %25 {strides = array<i32>} : memref<64x32xf32, #tpu.memory_space<vmem>>, vector<8x32xf32>,
    %cst_13 = arith.constant dense<0.000000e+00> : vector<8x128xf32>
    %27 = tpu.matmul %25, %2, %cst_13 {dimension_numbers = #tpu.dot_dimension_numbers<[1], [0], [0], [1], [0, 0, 1, 1], [], []>} : vector<8x32xf32>, vector<32x128xf32>, vector<8x128xf32> -> vector<8x128xf32>
    %28 = arith.addf %6, %27 : vector<8x128xf32>
    %29 = arith.negf %28 : vector<8x128xf32>
    %30 = math.exp %29 : vector<8x128xf32>
    %cst_14 = arith.constant 1.000000e+00 : f32
    %31 = vector.broadcast %cst_14 : f32 to vector<8x128xf32>
    %32 = arith.addf %31, %30 : vector<8x128xf32>
    %33 = arith.divf %31, %32 : vector<8x128xf32>
    %34 = math.tanh %28 : vector<8x128xf32>
    %35 = vector.extract_strided_slice %33 {offsets = [0, 0], sizes = [8, 32], strides = [1, 1]} : vector<8x128xf32> to vector<8x32xf32>
    %36 = vector.extract_strided_slice %33 {offsets = [0, 32], sizes = [8, 32], strides = [1, 1]} : vector<8x128xf32> to vector<8x32xf32>
    %37 = vector.extract_strided_slice %34 {offsets = [0, 64], sizes = [8, 32], strides = [1, 1]} : vector<8x128xf32> to vector<8x32xf32>
    %38 = vector.extract_strided_slice %33 {offsets = [0, 96], sizes = [8, 32], strides = [1, 1]} : vector<8x128xf32> to vector<8x32xf32>
    %39 = arith.mulf %36, %23 : vector<8x32xf32>
    %40 = arith.mulf %35, %37 : vector<8x32xf32>
    %41 = arith.addf %39, %40 : vector<8x32xf32>
    %42 = math.tanh %41 : vector<8x32xf32>
    %43 = arith.mulf %38, %42 : vector<8x32xf32>
    %c8 = arith.constant 8 : index
    %c0_15 = arith.constant 0 : index
    %44 = vector.load %arg8[%c8, %c0_15] : memref<64x32xf32, #tpu.memory_space<vmem>>, vector<8x32xf32>
    tpu.vector_store %arg8[%c8, %c0_15], %43 {strides = array<i32>} : memref<64x32xf32, #tpu.memory_space<vmem>>, vector<8x32xf32>,
    %cst_16 = arith.constant dense<0.000000e+00> : vector<8x128xf32>
    %45 = tpu.matmul %43, %2, %cst_16 {dimension_numbers = #tpu.dot_dimension_numbers<[1], [0], [0], [1], [0, 0, 1, 1], [], []>} : vector<8x32xf32>, vector<32x128xf32>, vector<8x128xf32> -> vector<8x128xf32>
    %46 = arith.addf %6, %45 : vector<8x128xf32>
    %47 = arith.negf %46 : vector<8x128xf32>
    %48 = math.exp %47 : vector<8x128xf32>
    %cst_17 = arith.constant 1.000000e+00 : f32
    %49 = vector.broadcast %cst_17 : f32 to vector<8x128xf32>
    %50 = arith.addf %49, %48 : vector<8x128xf32>
    %51 = arith.divf %49, %50 : vector<8x128xf32>
    %52 = math.tanh %46 : vector<8x128xf32>
    %53 = vector.extract_strided_slice %51 {offsets = [0, 0], sizes = [8, 32], strides = [1, 1]} : vector<8x128xf32> to vector<8x32xf32>
    %54 = vector.extract_strided_slice %51 {offsets = [0, 32], sizes = [8, 32], strides = [1, 1]} : vector<8x128xf32> to vector<8x32xf32>
    %55 = vector.extract_strided_slice %52 {offsets = [0, 64], sizes = [8, 32], strides = [1, 1]} : vector<8x128xf32> to vector<8x32xf32>
    %56 = vector.extract_strided_slice %51 {offsets = [0, 96], sizes = [8, 32], strides = [1, 1]} : vector<8x128xf32> to vector<8x32xf32>
    %57 = arith.mulf %54, %41 : vector<8x32xf32>
    %58 = arith.mulf %53, %55 : vector<8x32xf32>
    %59 = arith.addf %57, %58 : vector<8x32xf32>
    %60 = math.tanh %59 : vector<8x32xf32>
    %61 = arith.mulf %56, %60 : vector<8x32xf32>
    %c16 = arith.constant 16 : index
    %c0_18 = arith.constant 0 : index
    %62 = vector.load %arg8[%c16, %c0_18] : memref<64x32xf32, #tpu.memory_space<vmem>>, vector<8x32xf32>
    tpu.vector_store %arg8[%c16, %c0_18], %61 {strides = array<i32>} : memref<64x32xf32, #tpu.memory_space<vmem>>, vector<8x32xf32>,
    %cst_19 = arith.constant dense<0.000000e+00> : vector<8x128xf32>
    %63 = tpu.matmul %61, %2, %cst_19 {dimension_numbers = #tpu.dot_dimension_numbers<[1], [0], [0], [1], [0, 0, 1, 1], [], []>} : vector<8x32xf32>, vector<32x128xf32>, vector<8x128xf32> -> vector<8x128xf32>
    %64 = arith.addf %6, %63 : vector<8x128xf32>
    %65 = arith.negf %64 : vector<8x128xf32>
    %66 = math.exp %65 : vector<8x128xf32>
    %cst_20 = arith.constant 1.000000e+00 : f32
    %67 = vector.broadcast %cst_20 : f32 to vector<8x128xf32>
    %68 = arith.addf %67, %66 : vector<8x128xf32>
    %69 = arith.divf %67, %68 : vector<8x128xf32>
    %70 = math.tanh %64 : vector<8x128xf32>
    %71 = vector.extract_strided_slice %69 {offsets = [0, 0], sizes = [8, 32], strides = [1, 1]} : vector<8x128xf32> to vector<8x32xf32>
    %72 = vector.extract_strided_slice %69 {offsets = [0, 32], sizes = [8, 32], strides = [1, 1]} : vector<8x128xf32> to vector<8x32xf32>
    %73 = vector.extract_strided_slice %70 {offsets = [0, 64], sizes = [8, 32], strides = [1, 1]} : vector<8x128xf32> to vector<8x32xf32>
    %74 = vector.extract_strided_slice %69 {offsets = [0, 96], sizes = [8, 32], strides = [1, 1]} : vector<8x128xf32> to vector<8x32xf32>
    %75 = arith.mulf %72, %59 : vector<8x32xf32>
    %76 = arith.mulf %71, %73 : vector<8x32xf32>
    %77 = arith.addf %75, %76 : vector<8x32xf32>
    %78 = math.tanh %77 : vector<8x32xf32>
    %79 = arith.mulf %74, %78 : vector<8x32xf32>
    %c24 = arith.constant 24 : index
    %c0_21 = arith.constant 0 : index
    %80 = vector.load %arg8[%c24, %c0_21] : memref<64x32xf32, #tpu.memory_space<vmem>>, vector<8x32xf32>
    tpu.vector_store %arg8[%c24, %c0_21], %79 {strides = array<i32>} : memref<64x32xf32, #tpu.memory_space<vmem>>, vector<8x32xf32>,
    %cst_22 = arith.constant dense<0.000000e+00> : vector<8x128xf32>
    %81 = tpu.matmul %79, %2, %cst_22 {dimension_numbers = #tpu.dot_dimension_numbers<[1], [0], [0], [1], [0, 0, 1, 1], [], []>} : vector<8x32xf32>, vector<32x128xf32>, vector<8x128xf32> -> vector<8x128xf32>
    %82 = arith.addf %6, %81 : vector<8x128xf32>
    %83 = arith.negf %82 : vector<8x128xf32>
    %84 = math.exp %83 : vector<8x128xf32>
    %cst_23 = arith.constant 1.000000e+00 : f32
    %85 = vector.broadcast %cst_23 : f32 to vector<8x128xf32>
    %86 = arith.addf %85, %84 : vector<8x128xf32>
    %87 = arith.divf %85, %86 : vector<8x128xf32>
    %88 = math.tanh %82 : vector<8x128xf32>
    %89 = vector.extract_strided_slice %87 {offsets = [0, 0], sizes = [8, 32], strides = [1, 1]} : vector<8x128xf32> to vector<8x32xf32>
    %90 = vector.extract_strided_slice %87 {offsets = [0, 32], sizes = [8, 32], strides = [1, 1]} : vector<8x128xf32> to vector<8x32xf32>
    %91 = vector.extract_strided_slice %88 {offsets = [0, 64], sizes = [8, 32], strides = [1, 1]} : vector<8x128xf32> to vector<8x32xf32>
    %92 = vector.extract_strided_slice %87 {offsets = [0, 96], sizes = [8, 32], strides = [1, 1]} : vector<8x128xf32> to vector<8x32xf32>
    %93 = arith.mulf %90, %77 : vector<8x32xf32>
    %94 = arith.mulf %89, %91 : vector<8x32xf32>
    %95 = arith.addf %93, %94 : vector<8x32xf32>
    %96 = math.tanh %95 : vector<8x32xf32>
    %97 = arith.mulf %92, %96 : vector<8x32xf32>
    %c32 = arith.constant 32 : index
    %c0_24 = arith.constant 0 : index
    %98 = vector.load %arg8[%c32, %c0_24] : memref<64x32xf32, #tpu.memory_space<vmem>>, vector<8x32xf32>
    tpu.vector_store %arg8[%c32, %c0_24], %97 {strides = array<i32>} : memref<64x32xf32, #tpu.memory_space<vmem>>, vector<8x32xf32>,
    %cst_25 = arith.constant dense<0.000000e+00> : vector<8x128xf32>
    %99 = tpu.matmul %97, %2, %cst_25 {dimension_numbers = #tpu.dot_dimension_numbers<[1], [0], [0], [1], [0, 0, 1, 1], [], []>} : vector<8x32xf32>, vector<32x128xf32>, vector<8x128xf32> -> vector<8x128xf32>
    %100 = arith.addf %6, %99 : vector<8x128xf32>
    %101 = arith.negf %100 : vector<8x128xf32>
    %102 = math.exp %101 : vector<8x128xf32>
    %cst_26 = arith.constant 1.000000e+00 : f32
    %103 = vector.broadcast %cst_26 : f32 to vector<8x128xf32>
    %104 = arith.addf %103, %102 : vector<8x128xf32>
    %105 = arith.divf %103, %104 : vector<8x128xf32>
    %106 = math.tanh %100 : vector<8x128xf32>
    %107 = vector.extract_strided_slice %105 {offsets = [0, 0], sizes = [8, 32], strides = [1, 1]} : vector<8x128xf32> to vector<8x32xf32>
    %108 = vector.extract_strided_slice %105 {offsets = [0, 32], sizes = [8, 32], strides = [1, 1]} : vector<8x128xf32> to vector<8x32xf32>
    %109 = vector.extract_strided_slice %106 {offsets = [0, 64], sizes = [8, 32], strides = [1, 1]} : vector<8x128xf32> to vector<8x32xf32>
    %110 = vector.extract_strided_slice %105 {offsets = [0, 96], sizes = [8, 32], strides = [1, 1]} : vector<8x128xf32> to vector<8x32xf32>
    %111 = arith.mulf %108, %95 : vector<8x32xf32>
    %112 = arith.mulf %107, %109 : vector<8x32xf32>
    %113 = arith.addf %111, %112 : vector<8x32xf32>
    %114 = math.tanh %113 : vector<8x32xf32>
    %115 = arith.mulf %110, %114 : vector<8x32xf32>
    %c40 = arith.constant 40 : index
    %c0_27 = arith.constant 0 : index
    %116 = vector.load %arg8[%c40, %c0_27] : memref<64x32xf32, #tpu.memory_space<vmem>>, vector<8x32xf32>
    tpu.vector_store %arg8[%c40, %c0_27], %115 {strides = array<i32>} : memref<64x32xf32, #tpu.memory_space<vmem>>, vector<8x32xf32>,
    %cst_28 = arith.constant dense<0.000000e+00> : vector<8x128xf32>
    %117 = tpu.matmul %115, %2, %cst_28 {dimension_numbers = #tpu.dot_dimension_numbers<[1], [0], [0], [1], [0, 0, 1, 1], [], []>} : vector<8x32xf32>, vector<32x128xf32>, vector<8x128xf32> -> vector<8x128xf32>
    %118 = arith.addf %6, %117 : vector<8x128xf32>
    %119 = arith.negf %118 : vector<8x128xf32>
    %120 = math.exp %119 : vector<8x128xf32>
    %cst_29 = arith.constant 1.000000e+00 : f32
    %121 = vector.broadcast %cst_29 : f32 to vector<8x128xf32>
    %122 = arith.addf %121, %120 : vector<8x128xf32>
    %123 = arith.divf %121, %122 : vector<8x128xf32>
    %124 = math.tanh %118 : vector<8x128xf32>
    %125 = vector.extract_strided_slice %123 {offsets = [0, 0], sizes = [8, 32], strides = [1, 1]} : vector<8x128xf32> to vector<8x32xf32>
    %126 = vector.extract_strided_slice %123 {offsets = [0, 32], sizes = [8, 32], strides = [1, 1]} : vector<8x128xf32> to vector<8x32xf32>
    %127 = vector.extract_strided_slice %124 {offsets = [0, 64], sizes = [8, 32], strides = [1, 1]} : vector<8x128xf32> to vector<8x32xf32>
    %128 = vector.extract_strided_slice %123 {offsets = [0, 96], sizes = [8, 32], strides = [1, 1]} : vector<8x128xf32> to vector<8x32xf32>
    %129 = arith.mulf %126, %113 : vector<8x32xf32>
    %130 = arith.mulf %125, %127 : vector<8x32xf32>
    %131 = arith.addf %129, %130 : vector<8x32xf32>
    %132 = math.tanh %131 : vector<8x32xf32>
    %133 = arith.mulf %128, %132 : vector<8x32xf32>
    %c48 = arith.constant 48 : index
    %c0_30 = arith.constant 0 : index
    %134 = vector.load %arg8[%c48, %c0_30] : memref<64x32xf32, #tpu.memory_space<vmem>>, vector<8x32xf32>
    tpu.vector_store %arg8[%c48, %c0_30], %133 {strides = array<i32>} : memref<64x32xf32, #tpu.memory_space<vmem>>, vector<8x32xf32>,
    %cst_31 = arith.constant dense<0.000000e+00> : vector<8x128xf32>
    %135 = tpu.matmul %133, %2, %cst_31 {dimension_numbers = #tpu.dot_dimension_numbers<[1], [0], [0], [1], [0, 0, 1, 1], [], []>} : vector<8x32xf32>, vector<32x128xf32>, vector<8x128xf32> -> vector<8x128xf32>
    %136 = arith.addf %6, %135 : vector<8x128xf32>
    %137 = arith.negf %136 : vector<8x128xf32>
    %138 = math.exp %137 : vector<8x128xf32>
    %cst_32 = arith.constant 1.000000e+00 : f32
    %139 = vector.broadcast %cst_32 : f32 to vector<8x128xf32>
    %140 = arith.addf %139, %138 : vector<8x128xf32>
    %141 = arith.divf %139, %140 : vector<8x128xf32>
    %142 = math.tanh %136 : vector<8x128xf32>
    %143 = vector.extract_strided_slice %141 {offsets = [0, 0], sizes = [8, 32], strides = [1, 1]} : vector<8x128xf32> to vector<8x32xf32>
    %144 = vector.extract_strided_slice %141 {offsets = [0, 32], sizes = [8, 32], strides = [1, 1]} : vector<8x128xf32> to vector<8x32xf32>
    %145 = vector.extract_strided_slice %142 {offsets = [0, 64], sizes = [8, 32], strides = [1, 1]} : vector<8x128xf32> to vector<8x32xf32>
    %146 = vector.extract_strided_slice %141 {offsets = [0, 96], sizes = [8, 32], strides = [1, 1]} : vector<8x128xf32> to vector<8x32xf32>
    %147 = arith.mulf %144, %131 : vector<8x32xf32>
    %148 = arith.mulf %143, %145 : vector<8x32xf32>
    %149 = arith.addf %147, %148 : vector<8x32xf32>
    %150 = math.tanh %149 : vector<8x32xf32>
    %151 = arith.mulf %146, %150 : vector<8x32xf32>
    %c56 = arith.constant 56 : index
    %c0_33 = arith.constant 0 : index
    %152 = vector.load %arg8[%c56, %c0_33] : memref<64x32xf32, #tpu.memory_space<vmem>>, vector<8x32xf32>
    tpu.vector_store %arg8[%c56, %c0_33], %151 {strides = array<i32>} : memref<64x32xf32, #tpu.memory_space<vmem>>, vector<8x32xf32>,
    %c0_34 = arith.constant 0 : index
    %c0_35 = arith.constant 0 : index
    %153 = vector.load %arg8[%c0_34, %c0_35] : memref<64x32xf32, #tpu.memory_space<vmem>>, vector<64x32xf32>
    %c0_36 = arith.constant 0 : index
    %c0_37 = arith.constant 0 : index
    %154 = vector.load %arg5[%c0_36, %c0_37] : memref<2x32xf32, #tpu.memory_space<vmem>>, vector<2x32xf32>
    %cst_38 = arith.constant dense<0.000000e+00> : vector<2x64xf32>
    %155 = tpu.matmul %154, %153, %cst_38 {dimension_numbers = #tpu.dot_dimension_numbers<[1], [1], [0], [0], [0, 0, 1, 0], [], []>} : vector<2x32xf32>, vector<64x32xf32>, vector<2x64xf32> -> vector<2x64xf32>
    %c0_39 = arith.constant 0 : index
    %c0_40 = arith.constant 0 : index
    %156 = vector.load %arg6[%c0_39, %c0_40] : memref<2x1xf32, #tpu.memory_space<vmem>>, vector<2x1xf32>
    %157 = vector.broadcast %156 : vector<2x1xf32> to vector<2x64xf32>
    %158 = arith.addf %155, %157 : vector<2x64xf32>
    %159 = math.tanh %158 : vector<2x64xf32>
    %c0_41 = arith.constant 0 : index
    %c0_42 = arith.constant 0 : index
    %c0_43 = arith.constant 0 : index
    %160 = vector.load %arg7[%c0_41, %c0_42, %c0_43] : memref<1x2x64xf32, #tpu.memory_space<vmem>>, vector<1x2x64xf32>
    %161 = vector.shape_cast %160 : vector<1x2x64xf32> to vector<2x64xf32>
    %162 = vector.shape_cast %159 : vector<2x64xf32> to vector<1x2x64xf32>
    tpu.vector_store %arg7[%c0_41, %c0_42, %c0_43], %162 {strides = array<i32>} : memref<1x2x64xf32, #tpu.memory_space<vmem>>, vector<1x2x64xf32>,
    return
  }
  func.func @transform_0(%arg0: i32) -> (i32, i32) {
    %c0_i32 = arith.constant 0 : i32
    %c0_i32_0 = arith.constant 0 : i32
    return %arg0, %c0_i32 : i32, i32
  }
  func.func @transform_1(%arg0: i32) -> (i32, i32) {
    %c0_i32 = arith.constant 0 : i32
    %c0_i32_0 = arith.constant 0 : i32
    %c0_i32_1 = arith.constant 0 : i32
    return %c0_i32, %c0_i32_0 : i32, i32
  }
  func.func @transform_2(%arg0: i32) -> (i32, i32) {
    %c0_i32 = arith.constant 0 : i32
    %c0_i32_0 = arith.constant 0 : i32
    %c0_i32_1 = arith.constant 0 : i32
    return %c0_i32, %c0_i32_0 : i32, i32
  }
  func.func @transform_3(%arg0: i32) -> (i32, i32) {
    %c0_i32 = arith.constant 0 : i32
    %c0_i32_0 = arith.constant 0 : i32
    %c0_i32_1 = arith.constant 0 : i32
    return %c0_i32, %c0_i32_0 : i32, i32
  }
  func.func @transform_4(%arg0: i32) -> (i32, i32) {
    %c0_i32 = arith.constant 0 : i32
    %c0_i32_0 = arith.constant 0 : i32
    %c0_i32_1 = arith.constant 0 : i32
    return %c0_i32, %c0_i32_0 : i32, i32
  }
  func.func @transform_5(%arg0: i32) -> (i32, i32) {
    %c0_i32 = arith.constant 0 : i32
    %c0_i32_0 = arith.constant 0 : i32
    %c0_i32_1 = arith.constant 0 : i32
    return %c0_i32, %c0_i32_0 : i32, i32
  }
  func.func @transform_6(%arg0: i32) -> (i32, i32, i32) {
    %c0_i32 = arith.constant 0 : i32
    %c0_i32_0 = arith.constant 0 : i32
    %c0_i32_1 = arith.constant 0 : i32
    return %arg0, %c0_i32, %c0_i32_0 : i32, i32, i32
  }
}

</mosaic_0001>

<llo_original>
// kernel: decoder_seq_apply.1
$region0: #{decoder_seq_apply.1}
  #allocation0 [shape = 'u32[]', space=smem, size = 0x4, offset = 0x4, fixed_abs, tag = 'smem constant byte address 0x4 - core index']
  #allocation1 [shape = 'u32[72,128]{1,0:T(1,128)}', space=vmem, size = 0x9000, scoped, tag = 'internal scratch']
  #allocation2 [shape = 'f32[64,32]{1,0:T(8,128)}', space=vmem, size = 0x8000, scoped, tag = 'scratch operand']
  %s0 = inlined_call_operand.vmem [shape: f32[8,32], index: 0, kind: input, shape index: {}]
  %s1 = inlined_call_operand.hbm [shape: f32[32,128], index: 1, kind: input, shape index: {}]
  %s2 = inlined_call_operand.hbm [shape: f32[32,128], index: 2, kind: input, shape index: {}]
  %s3 = inlined_call_operand.vmem [shape: f32[1,128], index: 3, kind: input, shape index: {}]
  %s4 = inlined_call_operand.vmem [shape: f32[2,32], index: 4, kind: input, shape index: {}]
  %s5 = inlined_call_operand.vmem [shape: f32[2,1], index: 5, kind: input, shape index: {}]
  %s6 = inlined_call_operand.vmem [shape: f32[1,2,64], index: 6, kind: output, shape index: {}]
  %s7 = sld [smem:[#allocation0]]
  $region42: #{decoder_seq_apply.1} parent=0
    _
  %s9 = ssub.s32 1, %s7
  %s10 = scalar_select 0, %s9, %s7
  $region1: #{decoder_seq_apply.1} parent=0
    #allocation3 [shape = 'u8[16384]{0}', space=vmem, size = 0x4000, scoped, tag = 'input window, operand 1, single buffered']
    #allocation4 [shape = 's32[1]{0}', space=sflag, size = 0x4, scoped, tag = 'scoped memory for decoder_seq_apply.1']
    #allocation5 [shape = 'u8[16384]{0}', space=vmem, size = 0x4000, scoped, tag = 'input window, operand 2, single buffered']
    #allocation6 [shape = 's32[1]{0}', space=sflag, size = 0x4, scoped, tag = 'scoped memory for decoder_seq_apply.1']
    %11 = vsyncpa [#allocation4], 0
    %12 = vsyncpa [#allocation6], 0
    // Predicated region
    $region2: #{decoder_seq_apply.1} parent=1 // pred_check
      _
    $region3: #{decoder_seq_apply.1} parent=1 // pred_check_branch
      %14 = sbr.rel (0) target = $region5
    $region4: #{decoder_seq_apply.1} parent=1 // pred_region
      _
    $region5: #{decoder_seq_apply.1} parent=1 // pred_fallthru
      _
    // Predicated region
    $region6: #{decoder_seq_apply.1} parent=1 // pred_check
      _
    $region7: #{decoder_seq_apply.1} parent=1 // pred_check_branch
      %16 = sbr.rel (0) target = $region9
    $region8: #{decoder_seq_apply.1} parent=1 // pred_region
      %18 = vsyncadd [#allocation4], 0
      %s19 = sshll.u32 %s1, 4
      %s20 = int_to_ptr.hbm [resolvable:$true] %s19
      %s21 = sshll.u32 [#allocation3], 4
      %s22 = int_to_ptr.vmem [resolvable:$true] %s21
      %27 = dma.hbm_to_vmem [thread:$0]  %s20, 512, %s22, [#allocation4], 128, 128, 8
    $region9: #{decoder_seq_apply.1} parent=1 // pred_fallthru
      _
    // Predicated region
    $region10: #{decoder_seq_apply.1} parent=1 // pred_check
      _
    $region11: #{decoder_seq_apply.1} parent=1 // pred_check_branch
      %29 = sbr.rel (0) target = $region13
    $region12: #{decoder_seq_apply.1} parent=1 // pred_region
      %31 = vsyncadd [#allocation6], 0
      %s32 = sshll.u32 %s2, 4
      %s33 = int_to_ptr.hbm [resolvable:$true] %s32
      %s34 = sshll.u32 [#allocation5], 4
      %s35 = int_to_ptr.vmem [resolvable:$true] %s34
      %40 = dma.hbm_to_vmem [thread:$0]  %s33, 512, %s35, [#allocation6], 128, 128, 8
    $region13: #{decoder_seq_apply.1} parent=1 // pred_fallthru
      _
    // Predicated region
    $region14: #{decoder_seq_apply.1} parent=1 // pred_check
      _
    $region15: #{decoder_seq_apply.1} parent=1 // pred_check_branch
      %42 = sbr.rel (0) target = $region17
    $region16: #{decoder_seq_apply.1} parent=1 // pred_region
      _
    $region17: #{decoder_seq_apply.1} parent=1 // pred_fallthru
      _
    // Predicated region
    $region18: #{decoder_seq_apply.1} parent=1 // pred_check
      _
    $region19: #{decoder_seq_apply.1} parent=1 // pred_check_branch
      %44 = sbr.rel (0) target = $region21
    $region20: #{decoder_seq_apply.1} parent=1 // pred_region
      _
    $region21: #{decoder_seq_apply.1} parent=1 // pred_fallthru
      _
    // Predicated region
    $region22: #{decoder_seq_apply.1} parent=1 // pred_check
      _
    $region23: #{decoder_seq_apply.1} parent=1 // pred_check_branch
      %46 = sbr.rel (0) target = $region25
    $region24: #{decoder_seq_apply.1} parent=1 // pred_region
      _
    $region25: #{decoder_seq_apply.1} parent=1 // pred_fallthru
      _
    // Predicated region
    $region26: #{decoder_seq_apply.1} parent=1 // pred_check
      _
    $region27: #{decoder_seq_apply.1} parent=1 // pred_check_branch
      %48 = sbr.rel (0) target = $region29
    $region28: #{decoder_seq_apply.1} parent=1 // pred_region
      %50 = dma.done [#allocation4], 512
    $region29: #{decoder_seq_apply.1} parent=1 // pred_fallthru
      _
    // Predicated region
    $region30: #{decoder_seq_apply.1} parent=1 // pred_check
      _
    $region31: #{decoder_seq_apply.1} parent=1 // pred_check_branch
      %52 = sbr.rel (0) target = $region33
    $region32: #{decoder_seq_apply.1} parent=1 // pred_region
      %54 = dma.done [#allocation6], 512
    $region33: #{decoder_seq_apply.1} parent=1 // pred_fallthru
      _
    %v55 = vld [vmem:[%s0] sm:$0xff]
    %v56 = vld [vmem:[#allocation3] sm:$0xff]
    %v57 = vld [vmem:[#allocation3 + $0x8] sm:$0xff]
    %v58 = vld [vmem:[#allocation3 + $0x10] sm:$0xff]
    %v59 = vld [vmem:[#allocation3 + $0x18] sm:$0xff]
    %v60 = vld [vmem:[#allocation5] sm:$0xff]
    %v61 = vld [vmem:[#allocation5 + $0x8] sm:$0xff]
    %v62 = vld [vmem:[#allocation5 + $0x10] sm:$0xff]
    %v63 = vld [vmem:[#allocation5 + $0x18] sm:$0xff]
    %v64 = vld [vmem:[%s3] sm:$0x1]
    %v66 = vperm.slane %v64, 0
    %vm68 = vcmask 261120
    %v70 = vsel %vm68, %v55, 0
    %72 = vmatpush.msra.mxu0 0.0
    %73 = vmatpush.msra.mxu0 0.0
    %74 = vmatpush.msra.mxu0 0.0
    %75 = vmatpush.msra.mxu0 0.0
    %76 = vmatpush.msra.mxu0 0.0
    %77 = vmatpush.msra.mxu0 0.0
    %78 = vmatpush.msra.mxu0 0.0
    %79 = vmatpush.msra.mxu0 0.0
    %80 = vmatpush.msra.mxu0 0.0
    %81 = vmatpush.msra.mxu0 0.0
    %82 = vmatpush.msra.mxu0 0.0
    %83 = vmatpush.msra.mxu0 0.0
    %84 = vmatpush.msra.mxu0 %v59
    %85 = vmatpush.msra.mxu0 %v58
    %86 = vmatpush.msra.mxu0 %v57
    %87 = vmatpush.msra.mxu0 %v56
    %88 = vmatmul.f32.gmra.mxu0 %v70
    %v89 = vpop.f32.mrf.mxu0
    %v90 = vadd.f32 %v66, %v89
    %91 = vdwg.mxu0
    %v93 = vsel %vm68, 0.0, 0
    %95 = vmatpush.msra.mxu0 0.0
    %96 = vmatpush.msra.mxu0 0.0
    %97 = vmatpush.msra.mxu0 0.0
    %98 = vmatpush.msra.mxu0 0.0
    %99 = vmatpush.msra.mxu0 0.0
    %100 = vmatpush.msra.mxu0 0.0
    %101 = vmatpush.msra.mxu0 0.0
    %102 = vmatpush.msra.mxu0 0.0
    %103 = vmatpush.msra.mxu0 0.0
    %104 = vmatpush.msra.mxu0 0.0
    %105 = vmatpush.msra.mxu0 0.0
    %106 = vmatpush.msra.mxu0 0.0
    %107 = vmatpush.msra.mxu0 %v63
    %108 = vmatpush.msra.mxu0 %v62
    %109 = vmatpush.msra.mxu0 %v61
    %110 = vmatpush.msra.mxu0 %v60
    %111 = vmatmul.f32.gmra.mxu0 %v93
    %v112 = vpop.f32.mrf.mxu0
    %v113 = vadd.f32 0.0, %v112
    %114 = vdwg.mxu0
    %v115 = vadd.f32 %v90, %v113
    %v116 = vxor.u32 %v115, 2147483648
    %v117 = vmul.f32 %v116, 1.442695
    %v118 = vpow.pop %v117
    %v119 = vadd.f32 %v118, 1.0
    %v120 = vrcp.pop %v119
    %v121 = vmul.f32 %v119, %v120
    %v122 = vsub.f32 1.0, %v121
    %v123 = vmul.f32 %v120, %v122
    %v124 = vadd.f32 %v120, %v123
    %vm125 = vweird.f32 %v119
    %vm126 = vweird.f32 %v120
    %vm127 = vmor %vm125, %vm126
    %v128 = vsel %vm127, %v120, %v124
    %v129 = vand.u32 2147483647, %v119
    %vm130 = vcmp.eq.f32.partialorder %v129, 8.507059e+37
    %v131 = vand.u32 %v119, 2147483648
    %v132 = vor.u32 1.1754944e-38, %v131
    %v133 = vsel %vm130, %v132, %v128
    %v134 = vmul.f32 1.0, %v133
    %v135 = vtanh.pop %v115
    %v136 = vmul.f32 %v134, 0.0
    %138 = vrot.lane.b32.xlu0 %v135, 64
    %v139 = vpop.permute.xlu0 %138
    %v141 = vmul.f32 %v134, %v139
    %143 = vrot.lane.b32.xlu0 %v141, 32
    %v144 = vpop.permute.xlu0 %143
    %v146 = vadd.f32 %v136, %v144
    %v147 = vtanh.pop %v146
    %149 = vrot.lane.b32.xlu0 %v147, 64
    %v150 = vpop.permute.xlu0 %149
    %v152 = vmul.f32 %v134, %v150
    %154 = vrot.lane.b32.xlu0 %v152, 32
    %v155 = vpop.permute.xlu0 %154
    %157 = vst.msk [vmem:[#allocation2] sm:$0xff] %vm68, %v155
    %v158 = vsel %vm68, %v155, 0
    %160 = vmatpush.msra.mxu0 0.0
    %161 = vmatpush.msra.mxu0 0.0
    %162 = vmatpush.msra.mxu0 0.0
    %163 = vmatpush.msra.mxu0 0.0
    %164 = vmatpush.msra.mxu0 0.0
    %165 = vmatpush.msra.mxu0 0.0
    %166 = vmatpush.msra.mxu0 0.0
    %167 = vmatpush.msra.mxu0 0.0
    %168 = vmatpush.msra.mxu0 0.0
    %169 = vmatpush.msra.mxu0 0.0
    %170 = vmatpush.msra.mxu0 0.0
    %171 = vmatpush.msra.mxu0 0.0
    %172 = vmatpush.msra.mxu0 %v63
    %173 = vmatpush.msra.mxu0 %v62
    %174 = vmatpush.msra.mxu0 %v61
    %175 = vmatpush.msra.mxu0 %v60
    %176 = vmatmul.f32.gmra.mxu0 %v158
    %v177 = vpop.f32.mrf.mxu0
    %v178 = vadd.f32 0.0, %v177
    %179 = vdwg.mxu0
    %v180 = vadd.f32 %v90, %v178
    %v181 = vxor.u32 %v180, 2147483648
    %v182 = vmul.f32 %v181, 1.442695
    %v183 = vpow.pop %v182
    %v184 = vadd.f32 %v183, 1.0
    %v185 = vrcp.pop %v184
    %v186 = vmul.f32 %v184, %v185
    %v187 = vsub.f32 1.0, %v186
    %v188 = vmul.f32 %v185, %v187
    %v189 = vadd.f32 %v185, %v188
    %vm190 = vweird.f32 %v184
    %vm191 = vweird.f32 %v185
    %vm192 = vmor %vm190, %vm191
    %v193 = vsel %vm192, %v185, %v189
    %v194 = vand.u32 2147483647, %v184
    %vm195 = vcmp.eq.f32.partialorder %v194, 8.507059e+37
    %v196 = vand.u32 %v184, 2147483648
    %v197 = vor.u32 1.1754944e-38, %v196
    %v198 = vsel %vm195, %v197, %v193
    %v199 = vmul.f32 1.0, %v198
    %v200 = vtanh.pop %v180
    %v201 = vmul.f32 %v199, %v146
    %203 = vrot.lane.b32.xlu0 %v200, 64
    %v204 = vpop.permute.xlu0 %203
    %v206 = vmul.f32 %v199, %v204
    %208 = vrot.lane.b32.xlu0 %v206, 32
    %v209 = vpop.permute.xlu0 %208
    %v211 = vadd.f32 %v201, %v209
    %v212 = vtanh.pop %v211
    %214 = vrot.lane.b32.xlu0 %v212, 64
    %v215 = vpop.permute.xlu0 %214
    %v217 = vmul.f32 %v199, %v215
    %219 = vrot.lane.b32.xlu0 %v217, 32
    %v220 = vpop.permute.xlu0 %219
    %222 = vst.msk [vmem:[#allocation2 + $0x8] sm:$0xff] %vm68, %v220
    %v223 = vsel %vm68, %v220, 0
    %225 = vmatpush.msra.mxu0 0.0
    %226 = vmatpush.msra.mxu0 0.0
    %227 = vmatpush.msra.mxu0 0.0
    %228 = vmatpush.msra.mxu0 0.0
    %229 = vmatpush.msra.mxu0 0.0
    %230 = vmatpush.msra.mxu0 0.0
    %231 = vmatpush.msra.mxu0 0.0
    %232 = vmatpush.msra.mxu0 0.0
    %233 = vmatpush.msra.mxu0 0.0
    %234 = vmatpush.msra.mxu0 0.0
    %235 = vmatpush.msra.mxu0 0.0
    %236 = vmatpush.msra.mxu0 0.0
    %237 = vmatpush.msra.mxu0 %v63
    %238 = vmatpush.msra.mxu0 %v62
    %239 = vmatpush.msra.mxu0 %v61
    %240 = vmatpush.msra.mxu0 %v60
    %241 = vmatmul.f32.gmra.mxu0 %v223
    %v242 = vpop.f32.mrf.mxu0
    %v243 = vadd.f32 0.0, %v242
    %244 = vdwg.mxu0
    %v245 = vadd.f32 %v90, %v243
    %v246 = vxor.u32 %v245, 2147483648
    %v247 = vmul.f32 %v246, 1.442695
    %v248 = vpow.pop %v247
    %v249 = vadd.f32 %v248, 1.0
    %v250 = vrcp.pop %v249
    %v251 = vmul.f32 %v249, %v250
    %v252 = vsub.f32 1.0, %v251
    %v253 = vmul.f32 %v250, %v252
    %v254 = vadd.f32 %v250, %v253
    %vm255 = vweird.f32 %v249
    %vm256 = vweird.f32 %v250
    %vm257 = vmor %vm255, %vm256
    %v258 = vsel %vm257, %v250, %v254
    %v259 = vand.u32 2147483647, %v249
    %vm260 = vcmp.eq.f32.partialorder %v259, 8.507059e+37
    %v261 = vand.u32 %v249, 2147483648
    %v262 = vor.u32 1.1754944e-38, %v261
    %v263 = vsel %vm260, %v262, %v258
    %v264 = vmul.f32 1.0, %v263
    %v265 = vtanh.pop %v245
    %v266 = vmul.f32 %v264, %v211
    %268 = vrot.lane.b32.xlu0 %v265, 64
    %v269 = vpop.permute.xlu0 %268
    %v271 = vmul.f32 %v264, %v269
    %273 = vrot.lane.b32.xlu0 %v271, 32
    %v274 = vpop.permute.xlu0 %273
    %v276 = vadd.f32 %v266, %v274
    %v277 = vtanh.pop %v276
    %279 = vrot.lane.b32.xlu0 %v277, 64
    %v280 = vpop.permute.xlu0 %279
    %v282 = vmul.f32 %v264, %v280
    %284 = vrot.lane.b32.xlu0 %v282, 32
    %v285 = vpop.permute.xlu0 %284
    %287 = vst.msk [vmem:[#allocation2 + $0x10] sm:$0xff] %vm68, %v285
    %v288 = vsel %vm68, %v285, 0
    %290 = vmatpush.msra.mxu0 0.0
    %291 = vmatpush.msra.mxu0 0.0
    %292 = vmatpush.msra.mxu0 0.0
    %293 = vmatpush.msra.mxu0 0.0
    %294 = vmatpush.msra.mxu0 0.0
    %295 = vmatpush.msra.mxu0 0.0
    %296 = vmatpush.msra.mxu0 0.0
    %297 = vmatpush.msra.mxu0 0.0
    %298 = vmatpush.msra.mxu0 0.0
    %299 = vmatpush.msra.mxu0 0.0
    %300 = vmatpush.msra.mxu0 0.0
    %301 = vmatpush.msra.mxu0 0.0
    %302 = vmatpush.msra.mxu0 %v63
    %303 = vmatpush.msra.mxu0 %v62
    %304 = vmatpush.msra.mxu0 %v61
    %305 = vmatpush.msra.mxu0 %v60
    %306 = vmatmul.f32.gmra.mxu0 %v288
    %v307 = vpop.f32.mrf.mxu0
    %v308 = vadd.f32 0.0, %v307
    %309 = vdwg.mxu0
    %v310 = vadd.f32 %v90, %v308
    %v311 = vxor.u32 %v310, 2147483648
    %v312 = vmul.f32 %v311, 1.442695
    %v313 = vpow.pop %v312
    %v314 = vadd.f32 %v313, 1.0
    %v315 = vrcp.pop %v314
    %v316 = vmul.f32 %v314, %v315
    %v317 = vsub.f32 1.0, %v316
    %v318 = vmul.f32 %v315, %v317
    %v319 = vadd.f32 %v315, %v318
    %vm320 = vweird.f32 %v314
    %vm321 = vweird.f32 %v315
    %vm322 = vmor %vm320, %vm321
    %v323 = vsel %vm322, %v315, %v319
    %v324 = vand.u32 2147483647, %v314
    %vm325 = vcmp.eq.f32.partialorder %v324, 8.507059e+37
    %v326 = vand.u32 %v314, 2147483648
    %v327 = vor.u32 1.1754944e-38, %v326
    %v328 = vsel %vm325, %v327, %v323
    %v329 = vmul.f32 1.0, %v328
    %v330 = vtanh.pop %v310
    %v331 = vmul.f32 %v329, %v276
    %333 = vrot.lane.b32.xlu0 %v330, 64
    %v334 = vpop.permute.xlu0 %333
    %v336 = vmul.f32 %v329, %v334
    %338 = vrot.lane.b32.xlu0 %v336, 32
    %v339 = vpop.permute.xlu0 %338
    %v341 = vadd.f32 %v331, %v339
    %v342 = vtanh.pop %v341
    %344 = vrot.lane.b32.xlu0 %v342, 64
    %v345 = vpop.permute.xlu0 %344
    %v347 = vmul.f32 %v329, %v345
    %349 = vrot.lane.b32.xlu0 %v347, 32
    %v350 = vpop.permute.xlu0 %349
    %352 = vst.msk [vmem:[#allocation2 + $0x18] sm:$0xff] %vm68, %v350
    %v353 = vsel %vm68, %v350, 0
    %355 = vmatpush.msra.mxu0 0.0
    %356 = vmatpush.msra.mxu0 0.0
    %357 = vmatpush.msra.mxu0 0.0
    %358 = vmatpush.msra.mxu0 0.0
    %359 = vmatpush.msra.mxu0 0.0
    %360 = vmatpush.msra.mxu0 0.0
    %361 = vmatpush.msra.mxu0 0.0
    %362 = vmatpush.msra.mxu0 0.0
    %363 = vmatpush.msra.mxu0 0.0
    %364 = vmatpush.msra.mxu0 0.0
    %365 = vmatpush.msra.mxu0 0.0
    %366 = vmatpush.msra.mxu0 0.0
    %367 = vmatpush.msra.mxu0 %v63
    %368 = vmatpush.msra.mxu0 %v62
    %369 = vmatpush.msra.mxu0 %v61
    %370 = vmatpush.msra.mxu0 %v60
    %371 = vmatmul.f32.gmra.mxu0 %v353
    %v372 = vpop.f32.mrf.mxu0
    %v373 = vadd.f32 0.0, %v372
    %374 = vdwg.mxu0
    %v375 = vadd.f32 %v90, %v373
    %v376 = vxor.u32 %v375, 2147483648
    %v377 = vmul.f32 %v376, 1.442695
    %v378 = vpow.pop %v377
    %v379 = vadd.f32 %v378, 1.0
    %v380 = vrcp.pop %v379
    %v381 = vmul.f32 %v379, %v380
    %v382 = vsub.f32 1.0, %v381
    %v383 = vmul.f32 %v380, %v382
    %v384 = vadd.f32 %v380, %v383
    %vm385 = vweird.f32 %v379
    %vm386 = vweird.f32 %v380
    %vm387 = vmor %vm385, %vm386
    %v388 = vsel %vm387, %v380, %v384
    %v389 = vand.u32 2147483647, %v379
    %vm390 = vcmp.eq.f32.partialorder %v389, 8.507059e+37
    %v391 = vand.u32 %v379, 2147483648
    %v392 = vor.u32 1.1754944e-38, %v391
    %v393 = vsel %vm390, %v392, %v388
    %v394 = vmul.f32 1.0, %v393
    %v395 = vtanh.pop %v375
    %v396 = vmul.f32 %v394, %v341
    %398 = vrot.lane.b32.xlu0 %v395, 64
    %v399 = vpop.permute.xlu0 %398
    %v401 = vmul.f32 %v394, %v399
    %403 = vrot.lane.b32.xlu0 %v401, 32
    %v404 = vpop.permute.xlu0 %403
    %v406 = vadd.f32 %v396, %v404
    %v407 = vtanh.pop %v406
    %409 = vrot.lane.b32.xlu0 %v407, 64
    %v410 = vpop.permute.xlu0 %409
    %v412 = vmul.f32 %v394, %v410
    %414 = vrot.lane.b32.xlu0 %v412, 32
    %v415 = vpop.permute.xlu0 %414
    %417 = vst.msk [vmem:[#allocation2 + $0x20] sm:$0xff] %vm68, %v415
    %v418 = vsel %vm68, %v415, 0
    %420 = vmatpush.msra.mxu0 0.0
    %421 = vmatpush.msra.mxu0 0.0
    %422 = vmatpush.msra.mxu0 0.0
    %423 = vmatpush.msra.mxu0 0.0
    %424 = vmatpush.msra.mxu0 0.0
    %425 = vmatpush.msra.mxu0 0.0
    %426 = vmatpush.msra.mxu0 0.0
    %427 = vmatpush.msra.mxu0 0.0
    %428 = vmatpush.msra.mxu0 0.0
    %429 = vmatpush.msra.mxu0 0.0
    %430 = vmatpush.msra.mxu0 0.0
    %431 = vmatpush.msra.mxu0 0.0
    %432 = vmatpush.msra.mxu0 %v63
    %433 = vmatpush.msra.mxu0 %v62
    %434 = vmatpush.msra.mxu0 %v61
    %435 = vmatpush.msra.mxu0 %v60
    %436 = vmatmul.f32.gmra.mxu0 %v418
    %v437 = vpop.f32.mrf.mxu0
    %v438 = vadd.f32 0.0, %v437
    %439 = vdwg.mxu0
    %v440 = vadd.f32 %v90, %v438
    %v441 = vxor.u32 %v440, 2147483648
    %v442 = vmul.f32 %v441, 1.442695
    %v443 = vpow.pop %v442
    %v444 = vadd.f32 %v443, 1.0
    %v445 = vrcp.pop %v444
    %v446 = vmul.f32 %v444, %v445
    %v447 = vsub.f32 1.0, %v446
    %v448 = vmul.f32 %v445, %v447
    %v449 = vadd.f32 %v445, %v448
    %vm450 = vweird.f32 %v444
    %vm451 = vweird.f32 %v445
    %vm452 = vmor %vm450, %vm451
    %v453 = vsel %vm452, %v445, %v449
    %v454 = vand.u32 2147483647, %v444
    %vm455 = vcmp.eq.f32.partialorder %v454, 8.507059e+37
    %v456 = vand.u32 %v444, 2147483648
    %v457 = vor.u32 1.1754944e-38, %v456
    %v458 = vsel %vm455, %v457, %v453
    %v459 = vmul.f32 1.0, %v458
    %v460 = vtanh.pop %v440
    %v461 = vmul.f32 %v459, %v406
    %463 = vrot.lane.b32.xlu0 %v460, 64
    %v464 = vpop.permute.xlu0 %463
    %v466 = vmul.f32 %v459, %v464
    %468 = vrot.lane.b32.xlu0 %v466, 32
    %v469 = vpop.permute.xlu0 %468
    %v471 = vadd.f32 %v461, %v469
    %v472 = vtanh.pop %v471
    %474 = vrot.lane.b32.xlu0 %v472, 64
    %v475 = vpop.permute.xlu0 %474
    %v477 = vmul.f32 %v459, %v475
    %479 = vrot.lane.b32.xlu0 %v477, 32
    %v480 = vpop.permute.xlu0 %479
    %482 = vst.msk [vmem:[#allocation2 + $0x28] sm:$0xff] %vm68, %v480
    %v483 = vsel %vm68, %v480, 0
    %485 = vmatpush.msra.mxu0 0.0
    %486 = vmatpush.msra.mxu0 0.0
    %487 = vmatpush.msra.mxu0 0.0
    %488 = vmatpush.msra.mxu0 0.0
    %489 = vmatpush.msra.mxu0 0.0
    %490 = vmatpush.msra.mxu0 0.0
    %491 = vmatpush.msra.mxu0 0.0
    %492 = vmatpush.msra.mxu0 0.0
    %493 = vmatpush.msra.mxu0 0.0
    %494 = vmatpush.msra.mxu0 0.0
    %495 = vmatpush.msra.mxu0 0.0
    %496 = vmatpush.msra.mxu0 0.0
    %497 = vmatpush.msra.mxu0 %v63
    %498 = vmatpush.msra.mxu0 %v62
    %499 = vmatpush.msra.mxu0 %v61
    %500 = vmatpush.msra.mxu0 %v60
    %501 = vmatmul.f32.gmra.mxu0 %v483
    %v502 = vpop.f32.mrf.mxu0
    %v503 = vadd.f32 0.0, %v502
    %504 = vdwg.mxu0
    %v505 = vadd.f32 %v90, %v503
    %v506 = vxor.u32 %v505, 2147483648
    %v507 = vmul.f32 %v506, 1.442695
    %v508 = vpow.pop %v507
    %v509 = vadd.f32 %v508, 1.0
    %v510 = vrcp.pop %v509
    %v511 = vmul.f32 %v509, %v510
    %v512 = vsub.f32 1.0, %v511
    %v513 = vmul.f32 %v510, %v512
    %v514 = vadd.f32 %v510, %v513
    %vm515 = vweird.f32 %v509
    %vm516 = vweird.f32 %v510
    %vm517 = vmor %vm515, %vm516
    %v518 = vsel %vm517, %v510, %v514
    %v519 = vand.u32 2147483647, %v509
    %vm520 = vcmp.eq.f32.partialorder %v519, 8.507059e+37
    %v521 = vand.u32 %v509, 2147483648
    %v522 = vor.u32 1.1754944e-38, %v521
    %v523 = vsel %vm520, %v522, %v518
    %v524 = vmul.f32 1.0, %v523
    %v525 = vtanh.pop %v505
    %v526 = vmul.f32 %v524, %v471
    %528 = vrot.lane.b32.xlu0 %v525, 64
    %v529 = vpop.permute.xlu0 %528
    %v531 = vmul.f32 %v524, %v529
    %533 = vrot.lane.b32.xlu0 %v531, 32
    %v534 = vpop.permute.xlu0 %533
    %v536 = vadd.f32 %v526, %v534
    %v537 = vtanh.pop %v536
    %539 = vrot.lane.b32.xlu0 %v537, 64
    %v540 = vpop.permute.xlu0 %539
    %v542 = vmul.f32 %v524, %v540
    %544 = vrot.lane.b32.xlu0 %v542, 32
    %v545 = vpop.permute.xlu0 %544
    %547 = vst.msk [vmem:[#allocation2 + $0x30] sm:$0xff] %vm68, %v545
    %v548 = vsel %vm68, %v545, 0
    %550 = vmatpush.msra.mxu0 0.0
    %551 = vmatpush.msra.mxu0 0.0
    %552 = vmatpush.msra.mxu0 0.0
    %553 = vmatpush.msra.mxu0 0.0
    %554 = vmatpush.msra.mxu0 0.0
    %555 = vmatpush.msra.mxu0 0.0
    %556 = vmatpush.msra.mxu0 0.0
    %557 = vmatpush.msra.mxu0 0.0
    %558 = vmatpush.msra.mxu0 0.0
    %559 = vmatpush.msra.mxu0 0.0
    %560 = vmatpush.msra.mxu0 0.0
    %561 = vmatpush.msra.mxu0 0.0
    %562 = vmatpush.msra.mxu0 %v63
    %563 = vmatpush.msra.mxu0 %v62
    %564 = vmatpush.msra.mxu0 %v61
    %565 = vmatpush.msra.mxu0 %v60
    %566 = vmatmul.f32.gmra.mxu0 %v548
    %v567 = vpop.f32.mrf.mxu0
    %v568 = vadd.f32 0.0, %v567
    %569 = vdwg.mxu0
    %v570 = vadd.f32 %v90, %v568
    %v571 = vxor.u32 %v570, 2147483648
    %v572 = vmul.f32 %v571, 1.442695
    %v573 = vpow.pop %v572
    %v574 = vadd.f32 %v573, 1.0
    %v575 = vrcp.pop %v574
    %v576 = vmul.f32 %v574, %v575
    %v577 = vsub.f32 1.0, %v576
    %v578 = vmul.f32 %v575, %v577
    %v579 = vadd.f32 %v575, %v578
    %vm580 = vweird.f32 %v574
    %vm581 = vweird.f32 %v575
    %vm582 = vmor %vm580, %vm581
    %v583 = vsel %vm582, %v575, %v579
    %v584 = vand.u32 2147483647, %v574
    %vm585 = vcmp.eq.f32.partialorder %v584, 8.507059e+37
    %v586 = vand.u32 %v574, 2147483648
    %v587 = vor.u32 1.1754944e-38, %v586
    %v588 = vsel %vm585, %v587, %v583
    %v589 = vmul.f32 1.0, %v588
    %v590 = vtanh.pop %v570
    %v591 = vmul.f32 %v589, %v536
    %593 = vrot.lane.b32.xlu0 %v590, 64
    %v594 = vpop.permute.xlu0 %593
    %v596 = vmul.f32 %v589, %v594
    %598 = vrot.lane.b32.xlu0 %v596, 32
    %v599 = vpop.permute.xlu0 %598
    %v601 = vadd.f32 %v591, %v599
    %v602 = vtanh.pop %v601
    %604 = vrot.lane.b32.xlu0 %v602, 64
    %v605 = vpop.permute.xlu0 %604
    %v607 = vmul.f32 %v589, %v605
    %609 = vrot.lane.b32.xlu0 %v607, 32
    %v610 = vpop.permute.xlu0 %609
    %612 = vst.msk [vmem:[#allocation2 + $0x38] sm:$0xff] %vm68, %v610
    %v613 = vld [vmem:[#allocation2] sm:$0xff]
    %v614 = vld [vmem:[#allocation2 + $0x8] sm:$0xff]
    %v615 = vld [vmem:[#allocation2 + $0x10] sm:$0xff]
    %v616 = vld [vmem:[#allocation2 + $0x18] sm:$0xff]
    %v617 = vld [vmem:[#allocation2 + $0x20] sm:$0xff]
    %v618 = vld [vmem:[#allocation2 + $0x28] sm:$0xff]
    %v619 = vld [vmem:[#allocation2 + $0x30] sm:$0xff]
    %v620 = vld [vmem:[#allocation2 + $0x38] sm:$0xff]
    %v621 = vld [vmem:[%s4] sm:$0x3]
    %v622 = vld [vmem:[%s5] sm:$0x3]
    %624 = vset.pattern.permute.xlu0 0
    %625 = vperm.xlu0 %624, %v622
    %v626 = vpop.permute.xlu0 %625
    %v629 = vsel %vm68, %v621, 0
    %v632 = vsel %vm68, %v613, 0
    %v635 = vsel %vm68, %v614, 0
    %v638 = vsel %vm68, %v615, 0
    %v641 = vsel %vm68, %v616, 0
    %v644 = vsel %vm68, %v617, 0
    %v647 = vsel %vm68, %v618, 0
    %v650 = vsel %vm68, %v619, 0
    %v653 = vsel %vm68, %v620, 0
    %655 = vmatpush.xpose.msra.mxu0 0.0
    %656 = vmatpush.xpose.msra.mxu0 0.0
    %657 = vmatpush.xpose.msra.mxu0 0.0
    %658 = vmatpush.xpose.msra.mxu0 0.0
    %659 = vmatpush.xpose.msra.mxu0 0.0
    %660 = vmatpush.xpose.msra.mxu0 0.0
    %661 = vmatpush.xpose.msra.mxu0 0.0
    %662 = vmatpush.xpose.msra.mxu0 0.0
    %663 = vmatpush.xpose.msra.mxu0 %v653
    %664 = vmatpush.xpose.msra.mxu0 %v650
    %665 = vmatpush.xpose.msra.mxu0 %v647
    %666 = vmatpush.xpose.msra.mxu0 %v644
    %667 = vmatpush.xpose.msra.mxu0 %v641
    %668 = vmatpush.xpose.msra.mxu0 %v638
    %669 = vmatpush.xpose.msra.mxu0 %v635
    %670 = vmatpush.xpose.msra.mxu0 %v632
    %671 = vmatmul.f32.gmra.mxu0 %v629
    %v672 = vpop.f32.mrf.mxu0
    %v673 = vadd.f32 %v626, %v672
    %674 = vdwg.mxu0
    %v675 = vtanh.pop %v673
    %vm676 = vcmask 517120
    %677 = vst.msk [vmem:[%s6] sm:$0x3] %vm676, %v675
    // Predicated region
    $region34: #{decoder_seq_apply.1} parent=1 // pred_check
      _
    $region35: #{decoder_seq_apply.1} parent=1 // pred_check_branch
      %679 = sbr.rel (0) target = $region37
    $region36: #{decoder_seq_apply.1} parent=1 // pred_region
      _
    $region37: #{decoder_seq_apply.1} parent=1 // pred_fallthru
      _
    // Predicated region
    $region38: #{decoder_seq_apply.1} parent=1 // pred_check
      _
    $region39: #{decoder_seq_apply.1} parent=1 // pred_check_branch
      %681 = sbr.rel (0) target = $region41
    $region40: #{decoder_seq_apply.1} parent=1 // pred_region
      _
    $region41: #{decoder_seq_apply.1} parent=1 // pred_fallthru
      _
    %682 = vsyncpa [#allocation4], 1
    %683 = vsyncpa [#allocation6], 1

</llo_original>
